<compile_context>
chip_gen: v6e
topology: v6e:2x2x1
jax: 0.10.0
libtpu: 0.0.40
codegen_flags: <defaults>
</compile_context>

<pallas_src>
import jax
import jax.numpy as jnp
from jax.experimental import pallas as pl
from jax.experimental.pallas import tpu as pltpu

INPUT_FEATURES = 9
HIDDEN_FEATURES = INPUT_FEATURES * INPUT_FEATURES  # 81
NEG_SLOPE = 0.01  # F.leaky_relu default


def _round_up(x, m):
    return ((x + m - 1) // m) * m


def _default_batch_tile(batch):
    """Multiple of 128, capped at 4096 (VMEM-safe on v7x), and split so the
    grid has >= 2 steps whenever possible (both v7x TensorCores busy)."""
    b128 = _round_up(max(batch, 1), 128)
    if b128 <= 128:
        return 128
    half = _round_up((b128 + 1) // 2, 128)
    return min(4096, half)


def mlp_kernel(x_ref, w1_ref, b1_ref, w2_ref, b2_ref,
               w3_ref, b3_ref, w4_ref, b4_ref, o_ref):
    # x_ref: (bt, 9) f32; wN_ref: PyTorch-layout (out, in) bf16;
    # b1..b3: (out, 1) f32 VMEM columns; b4: (1, 1) f32 SMEM scalar;
    # o_ref: (1, bt) f32 lane-dense output row.

    # Cast in-kernel (no extra HBM pass in the wrapper).
    x = x_ref[...].astype(jnp.bfloat16)                              # (bt, 9)

    # Layer 1: contract the 9-wide feature dim of both operands -> (81, bt).
    # (the only relayout in the kernel is on this 9-wide input tile)
    z = jax.lax.dot_general(
        w1_ref[...], x,
        dimension_numbers=(((1,), (1,)), ((), ())),
        preferred_element_type=jnp.float32)                          # (81, bt)
    z = z + b1_ref[...]
    h = jnp.maximum(z, NEG_SLOPE * z).astype(jnp.bfloat16)

    # Layer 2: (81,81) @ (81,bt) -> (81,bt), natural MXU layout.
    z = jnp.dot(w2_ref[...], h, preferred_element_type=jnp.float32)
    z = z + b2_ref[...]
    h = jnp.maximum(z, NEG_SLOPE * z).astype(jnp.bfloat16)

    # Layer 3: (9,81) @ (81,bt) -> (9,bt).
    z = jnp.dot(w3_ref[...], h, preferred_element_type=jnp.float32)
    z = z + b3_ref[...]
    h = jnp.maximum(z, NEG_SLOPE * z).astype(jnp.bfloat16)

    # Layer 4: (1,9) @ (9,bt) -> (1,bt): lane-dense output, no relayout.
    out_row = jnp.dot(w4_ref[...], h, preferred_element_type=jnp.float32)
    o_ref[...] = jax.nn.sigmoid(out_row + b4_ref[0, 0])


def multi_linear_forward(x, params, *, batch_tile=None):
    """x: [B, INPUT_FEATURES] float32.
    params: PyTorch nn.Linear layout — wN: (out_features, in_features) f32,
    bN: (out_features,) f32."""
    B, f_in = x.shape
    assert f_in == INPUT_FEATURES

    if batch_tile is None:
        batch_tile = _default_batch_tile(B)
    assert batch_tile % 128 == 0, "batch_tile must be a multiple of 128"

    num_tiles = (B + batch_tile - 1) // batch_tile
    b_pad = num_tiles * batch_tile
    if b_pad != B:
        # Only wrapper-side HBM pass, and only when B isn't tile-aligned.
        x = jnp.pad(x, ((0, b_pad - B), (0, 0)))

    # Tiny weight/bias prep (negligible traffic). Weights go bf16 for the MXU;
    # biases stay f32 (accumulation & epilogue are f32).
    w1 = params["w1"].astype(jnp.bfloat16)                       # (81, 9)
    w2 = params["w2"].astype(jnp.bfloat16)                       # (81, 81)
    w3 = params["w3"].astype(jnp.bfloat16)                       # (9, 81)
    w4 = params["w4"].reshape(1, INPUT_FEATURES).astype(jnp.bfloat16)
    b1 = params["b1"].reshape(HIDDEN_FEATURES, 1).astype(jnp.float32)
    b2 = params["b2"].reshape(HIDDEN_FEATURES, 1).astype(jnp.float32)
    b3 = params["b3"].reshape(INPUT_FEATURES, 1).astype(jnp.float32)
    b4 = params["b4"].reshape(1, 1).astype(jnp.float32)

    def resident_spec(shape):
        # whole array resident in VMEM, same block every grid step
        return pl.BlockSpec(shape, lambda i: (0, 0))

    out2d = pl.pallas_call(
        mlp_kernel,
        out_shape=jax.ShapeDtypeStruct((1, b_pad), jnp.float32),
        grid_spec=pltpu.PrefetchScalarGridSpec(
            num_scalar_prefetch=0,
            grid=(num_tiles,),
            in_specs=[
                pl.BlockSpec((batch_tile, INPUT_FEATURES), lambda i: (i, 0)),  # x f32
                resident_spec(w1.shape), resident_spec(b1.shape),
                resident_spec(w2.shape), resident_spec(b2.shape),
                resident_spec(w3.shape), resident_spec(b3.shape),
                resident_spec(w4.shape),
                pl.BlockSpec(memory_space=pltpu.MemorySpace.SMEM),             # b4 scalar
            ],
            out_specs=pl.BlockSpec((1, batch_tile), lambda i: (0, i)),         # lane-dense
        ),
        compiler_params=pltpu.CompilerParams(
            dimension_semantics=("parallel",)),
    )(x, w1, b1, w2, b2, w3, b3, w4, b4)

    return out2d[0, :B].reshape(B, 1)


def init_params(key):
    """Deterministic synthetic params in PyTorch nn.Linear layout:
    weight (out_features, in_features), bias (out_features,), f32."""
    ks = jax.random.split(key, 8)

    def lin(kw, kb, fan_in, fan_out):
        bound = 1.0 / jnp.sqrt(fan_in)
        w = jax.random.uniform(kw, (fan_out, fan_in), jnp.float32, -bound, bound)
        b = jax.random.uniform(kb, (fan_out,), jnp.float32, -bound, bound)
        return w, b

    w1, b1 = lin(ks[0], ks[1], INPUT_FEATURES, HIDDEN_FEATURES)
    w2, b2 = lin(ks[2], ks[3], HIDDEN_FEATURES, HIDDEN_FEATURES)
    w3, b3 = lin(ks[4], ks[5], HIDDEN_FEATURES, INPUT_FEATURES)
    w4, b4 = lin(ks[6], ks[7], INPUT_FEATURES, 1)
    return dict(w1=w1, b1=b1, w2=w2, b2=b2, w3=w3, b3=b3, w4=w4, b4=b4)


def reference_forward(x, p):
    h = x @ p["w1"].T + p["b1"]
    h = jnp.where(h > 0, h, NEG_SLOPE * h)
    h = h @ p["w2"].T + p["b2"]
    h = jnp.where(h > 0, h, NEG_SLOPE * h)
    h = h @ p["w3"].T + p["b3"]
    h = jnp.where(h > 0, h, NEG_SLOPE * h)
    h = h @ p["w4"].T + p["b4"]
    return jax.nn.sigmoid(h)


if __name__ == "__main__":
    key = jax.random.PRNGKey(0)
    k_x, k_p = jax.random.split(key)

    # Small test: batch not tile-aligned to exercise padding + multi-step grid
    # (default tile selection gives batch_tile=256 -> 2 grid steps).
    batch = 300
    x = jax.random.normal(k_x, (batch, INPUT_FEATURES), jnp.float32)
    params = init_params(k_p)

    out = multi_linear_forward(x, params)
    out = jax.block_until_ready(out)

    ref = reference_forward(x, params)
    assert out.shape == (batch, 1)
    # bf16 matmul operands -> compare against the f32 reference with a looser
    # tolerance (activation rounding compounds over 3 layers).
    assert jnp.allclose(out, ref, atol=2e-2, rtol=2e-2), "mismatch vs reference"

    print("KERNEL_OK")
</pallas_src>

<mosaic_0001>
module attributes {stable_mosaic.version = 11 : i64} {
  func.func @mlp_kernel(%arg0: i32, %arg1: memref<256x9xf32, #tpu.memory_space<vmem>>, %arg2: memref<81x9xbf16, #tpu.memory_space<vmem>>, %arg3: memref<81x1xf32, #tpu.memory_space<vmem>>, %arg4: memref<81x81xbf16, #tpu.memory_space<vmem>>, %arg5: memref<81x1xf32, #tpu.memory_space<vmem>>, %arg6: memref<9x81xbf16, #tpu.memory_space<vmem>>, %arg7: memref<9x1xf32, #tpu.memory_space<vmem>>, %arg8: memref<1x9xbf16, #tpu.memory_space<vmem>>, %arg9: memref<1x1xf32, #tpu.memory_space<smem>>, %arg10: memref<1x256xf32, #tpu.memory_space<vmem>>) attributes {dimension_semantics = [#tpu.dimension_semantics<parallel>], iteration_bounds = array<i64: 2>, scalar_prefetch = 0 : i64, scratch_operands = 0 : i64, tpu.core_type = #tpu.core_type<tc>, window_params = [{transform_indices = @transform_0, window_bounds = array<i64: 256, 9>}, {pipeline_mode = #tpu.pipeline_mode<synchronous>, transform_indices = @transform_1, window_bounds = array<i64: 81, 9>}, {pipeline_mode = #tpu.pipeline_mode<synchronous>, transform_indices = @transform_2, window_bounds = array<i64: 81, 1>}, {pipeline_mode = #tpu.pipeline_mode<synchronous>, transform_indices = @transform_3, window_bounds = array<i64: 81, 81>}, {pipeline_mode = #tpu.pipeline_mode<synchronous>, transform_indices = @transform_4, window_bounds = array<i64: 81, 1>}, {pipeline_mode = #tpu.pipeline_mode<synchronous>, transform_indices = @transform_5, window_bounds = array<i64: 9, 81>}, {pipeline_mode = #tpu.pipeline_mode<synchronous>, transform_indices = @transform_6, window_bounds = array<i64: 9, 1>}, {pipeline_mode = #tpu.pipeline_mode<synchronous>, transform_indices = @transform_7, window_bounds = array<i64: 1, 9>}, {transform_indices = @transform_8, window_bounds = array<i64: 1, 1>}, {transform_indices = @transform_9, window_bounds = array<i64: 1, 256>}]} {
    %c0 = arith.constant 0 : index
    %c0_0 = arith.constant 0 : index
    %0 = vector.load %arg1[%c0, %c0_0] : memref<256x9xf32, #tpu.memory_space<vmem>>, vector<256x9xf32>
    %1 = arith.truncf %0 : vector<256x9xf32> to vector<256x9xbf16>
    %c0_1 = arith.constant 0 : index
    %c0_2 = arith.constant 0 : index
    %2 = vector.load %arg2[%c0_1, %c0_2] : memref<81x9xbf16, #tpu.memory_space<vmem>>, vector<81x9xbf16>
    %cst = arith.constant dense<0.000000e+00> : vector<81x256xf32>
    %3 = tpu.matmul %2, %1, %cst {dimension_numbers = #tpu.dot_dimension_numbers<[1], [1], [0], [0], [0, 0, 1, 0], [], []>} : vector<81x9xbf16>, vector<256x9xbf16>, vector<81x256xf32> -> vector<81x256xf32>
    %c0_3 = arith.constant 0 : index
    %c0_4 = arith.constant 0 : index
    %4 = vector.load %arg3[%c0_3, %c0_4] : memref<81x1xf32, #tpu.memory_space<vmem>>, vector<81x1xf32>
    %5 = vector.broadcast %4 : vector<81x1xf32> to vector<81x256xf32>
    %6 = arith.addf %3, %5 : vector<81x256xf32>
    %cst_5 = arith.constant 0.00999999977 : f32
    %7 = vector.broadcast %cst_5 : f32 to vector<81x256xf32>
    %8 = arith.mulf %7, %6 : vector<81x256xf32>
    %9 = arith.maximumf %6, %8 : vector<81x256xf32>
    %10 = arith.truncf %9 : vector<81x256xf32> to vector<81x256xbf16>
    %c0_6 = arith.constant 0 : index
    %c0_7 = arith.constant 0 : index
    %11 = vector.load %arg4[%c0_6, %c0_7] : memref<81x81xbf16, #tpu.memory_space<vmem>>, vector<81x81xbf16>
    %cst_8 = arith.constant dense<0.000000e+00> : vector<81x256xf32>
    %12 = tpu.matmul %11, %10, %cst_8 {dimension_numbers = #tpu.dot_dimension_numbers<[1], [0], [0], [1], [0, 0, 1, 1], [], []>} : vector<81x81xbf16>, vector<81x256xbf16>, vector<81x256xf32> -> vector<81x256xf32>
    %c0_9 = arith.constant 0 : index
    %c0_10 = arith.constant 0 : index
    %13 = vector.load %arg5[%c0_9, %c0_10] : memref<81x1xf32, #tpu.memory_space<vmem>>, vector<81x1xf32>
    %14 = vector.broadcast %13 : vector<81x1xf32> to vector<81x256xf32>
    %15 = arith.addf %12, %14 : vector<81x256xf32>
    %cst_11 = arith.constant 0.00999999977 : f32
    %16 = vector.broadcast %cst_11 : f32 to vector<81x256xf32>
    %17 = arith.mulf %16, %15 : vector<81x256xf32>
    %18 = arith.maximumf %15, %17 : vector<81x256xf32>
    %19 = arith.truncf %18 : vector<81x256xf32> to vector<81x256xbf16>
    %c0_12 = arith.constant 0 : index
    %c0_13 = arith.constant 0 : index
    %20 = vector.load %arg6[%c0_12, %c0_13] : memref<9x81xbf16, #tpu.memory_space<vmem>>, vector<9x81xbf16>
    %cst_14 = arith.constant dense<0.000000e+00> : vector<9x256xf32>
    %21 = tpu.matmul %20, %19, %cst_14 {dimension_numbers = #tpu.dot_dimension_numbers<[1], [0], [0], [1], [0, 0, 1, 1], [], []>} : vector<9x81xbf16>, vector<81x256xbf16>, vector<9x256xf32> -> vector<9x256xf32>
    %c0_15 = arith.constant 0 : index
    %c0_16 = arith.constant 0 : index
    %22 = vector.load %arg7[%c0_15, %c0_16] : memref<9x1xf32, #tpu.memory_space<vmem>>, vector<9x1xf32>
    %23 = vector.broadcast %22 : vector<9x1xf32> to vector<9x256xf32>
    %24 = arith.addf %21, %23 : vector<9x256xf32>
    %cst_17 = arith.constant 0.00999999977 : f32
    %25 = vector.broadcast %cst_17 : f32 to vector<9x256xf32>
    %26 = arith.mulf %25, %24 : vector<9x256xf32>
    %27 = arith.maximumf %24, %26 : vector<9x256xf32>
    %28 = arith.truncf %27 : vector<9x256xf32> to vector<9x256xbf16>
    %c0_18 = arith.constant 0 : index
    %c0_19 = arith.constant 0 : index
    %29 = vector.load %arg8[%c0_18, %c0_19] : memref<1x9xbf16, #tpu.memory_space<vmem>>, vector<1x9xbf16>
    %cst_20 = arith.constant dense<0.000000e+00> : vector<1x256xf32>
    %30 = tpu.matmul %29, %28, %cst_20 {dimension_numbers = #tpu.dot_dimension_numbers<[1], [0], [0], [1], [0, 0, 1, 1], [], []>} : vector<1x9xbf16>, vector<9x256xbf16>, vector<1x256xf32> -> vector<1x256xf32>
    %c0_21 = arith.constant 0 : index
    %c0_22 = arith.constant 0 : index
    %31 = memref.load %arg9[%c0_21, %c0_22] : memref<1x1xf32, #tpu.memory_space<smem>>
    %32 = vector.broadcast %31 : f32 to vector<1x256xf32>
    %33 = arith.addf %30, %32 : vector<1x256xf32>
    %34 = arith.negf %33 : vector<1x256xf32>
    %35 = math.exp %34 : vector<1x256xf32>
    %cst_23 = arith.constant 1.000000e+00 : f32
    %36 = vector.broadcast %cst_23 : f32 to vector<1x256xf32>
    %37 = arith.addf %36, %35 : vector<1x256xf32>
    %38 = arith.divf %36, %37 : vector<1x256xf32>
    %c0_24 = arith.constant 0 : index
    %c0_25 = arith.constant 0 : index
    %39 = vector.load %arg10[%c0_24, %c0_25] : memref<1x256xf32, #tpu.memory_space<vmem>>, vector<1x256xf32>
    tpu.vector_store %arg10[%c0_24, %c0_25], %38 {strides = array<i32>} : memref<1x256xf32, #tpu.memory_space<vmem>>, vector<1x256xf32>,
    return
  }
  func.func @transform_0(%arg0: i32) -> (i32, i32) {
    %c0_i32 = arith.constant 0 : i32
    %c0_i32_0 = arith.constant 0 : i32
    return %arg0, %c0_i32 : i32, i32
  }
  func.func @transform_1(%arg0: i32) -> (i32, i32) {
    %c0_i32 = arith.constant 0 : i32
    %c0_i32_0 = arith.constant 0 : i32
    %c0_i32_1 = arith.constant 0 : i32
    return %c0_i32, %c0_i32_0 : i32, i32
  }
  func.func @transform_2(%arg0: i32) -> (i32, i32) {
    %c0_i32 = arith.constant 0 : i32
    %c0_i32_0 = arith.constant 0 : i32
    %c0_i32_1 = arith.constant 0 : i32
    return %c0_i32, %c0_i32_0 : i32, i32
  }
  func.func @transform_3(%arg0: i32) -> (i32, i32) {
    %c0_i32 = arith.constant 0 : i32
    %c0_i32_0 = arith.constant 0 : i32
    %c0_i32_1 = arith.constant 0 : i32
    return %c0_i32, %c0_i32_0 : i32, i32
  }
  func.func @transform_4(%arg0: i32) -> (i32, i32) {
    %c0_i32 = arith.constant 0 : i32
    %c0_i32_0 = arith.constant 0 : i32
    %c0_i32_1 = arith.constant 0 : i32
    return %c0_i32, %c0_i32_0 : i32, i32
  }
  func.func @transform_5(%arg0: i32) -> (i32, i32) {
    %c0_i32 = arith.constant 0 : i32
    %c0_i32_0 = arith.constant 0 : i32
    %c0_i32_1 = arith.constant 0 : i32
    return %c0_i32, %c0_i32_0 : i32, i32
  }
  func.func @transform_6(%arg0: i32) -> (i32, i32) {
    %c0_i32 = arith.constant 0 : i32
    %c0_i32_0 = arith.constant 0 : i32
    %c0_i32_1 = arith.constant 0 : i32
    return %c0_i32, %c0_i32_0 : i32, i32
  }
  func.func @transform_7(%arg0: i32) -> (i32, i32) {
    %c0_i32 = arith.constant 0 : i32
    %c0_i32_0 = arith.constant 0 : i32
    %c0_i32_1 = arith.constant 0 : i32
    return %c0_i32, %c0_i32_0 : i32, i32
  }
  func.func @transform_8(%arg0: i32) -> (i32, i32) {
    %c0_i32 = arith.constant 0 : i32
    %c0_i32_0 = arith.constant 0 : i32
    %c0_i32_1 = arith.constant 0 : i32
    return %c0_i32, %c0_i32_0 : i32, i32
  }
  func.func @transform_9(%arg0: i32) -> (i32, i32) {
    %c0_i32 = arith.constant 0 : i32
    %c0_i32_0 = arith.constant 0 : i32
    return %c0_i32, %arg0 : i32, i32
  }
}

</mosaic_0001>

<llo_original>
// kernel: tpu_custom_call.1
$region0: #{tpu_custom_call.1}
  #allocation0 [shape = 'u32[]', space=smem, size = 0x4, offset = 0x4, fixed_abs, tag = 'smem constant byte address 0x4 - core index']
  #allocation1 [shape = 'u32[144,128]{1,0:T(1,128)}', space=vmem, size = 0x12000, scoped, tag = 'internal scratch']
  #allocation2 [shape = 'f32[1,1]{1,0:T(1,128)S(6)}', space=smem, size = 0x200, scoped, tag = 'scoped memory for tpu_custom_call.1']
  %s0 = inlined_call_operand.vmem [shape: f32[512,9], index: 0, kind: input, shape index: {}]
  %s1 = inlined_call_operand.vmem [shape: bf16[81,9], index: 1, kind: input, shape index: {}]
  %s2 = inlined_call_operand.vmem [shape: f32[81,1], index: 2, kind: input, shape index: {}]
  %s3 = inlined_call_operand.vmem [shape: bf16[81,81], index: 3, kind: input, shape index: {}]
  %s4 = inlined_call_operand.vmem [shape: f32[81,1], index: 4, kind: input, shape index: {}]
  %s5 = inlined_call_operand.vmem [shape: bf16[9,81], index: 5, kind: input, shape index: {}]
  %s6 = inlined_call_operand.vmem [shape: f32[9,1], index: 6, kind: input, shape index: {}]
  %s7 = inlined_call_operand.vmem [shape: bf16[1,9], index: 7, kind: input, shape index: {}]
  %s8 = inlined_call_operand.<no memory space> [shape: f32[1,1], index: 8, kind: input, shape index: {}]
  %s9 = inlined_call_operand.hbm [shape: f32[1,512], index: 9, kind: output, shape index: {}]
  %s10 = sld [smem:[#allocation0]]
  $region69: #{tpu_custom_call.1} parent=0
    _
  %s12 = ssub.s32 1, %s10
  %s13 = scalar_select 0, %s12, %s10
  %14 = sst [smem:[#allocation2]] %s8
  $region1: #{tpu_custom_call.1} parent=0
    #allocation3 [shape = 'u8[2048]{0}', space=vmem, size = 0x800, scoped, tag = 'output window, operand 0']
    #allocation4 [shape = 's32[2]{0}', space=sflag, size = 0x8, scoped, tag = 'scoped memory for tpu_custom_call.1']
    %15 = vsyncpa [#allocation4], 0
    %s16 = scalar_lea.sflag [#allocation4], 1
    %17 = vsyncpa %s16, 0
    loop: start=0, step=1, limit=4
    $region2: #{tpu_custom_call.1} parent=1 // loop_pre_header
      _
    $region3: #{tpu_custom_call.1} parent=1 // loop_header
      %s19 = sphi 0, %s23
      %p20 = scmp.ge.s32.totalorder %s19, 4
      %s29 = sphi 0, %s31
      %s32 = sphi 0, %s29
      %s33 = sphi 0, %s32
      %s49 = sphi 0, %s33
      %s53 = sphi 0, %s53
      %s55 = sphi 0, %s53
      %s56 = sphi 0, %s55
      %s70 = sphi 0, %s56
      %s74 = sphi 0, %s74
      %s76 = sphi 0, %s74
      %s77 = sphi 0, %s76
      %s91 = sphi 0, %s77
      %s95 = sphi 0, %s95
      %s97 = sphi 0, %s95
      %s98 = sphi 0, %s97
      %s112 = sphi 0, %s98
      %s116 = sphi 0, %s116
      %s118 = sphi 0, %s116
      %s119 = sphi 0, %s118
      %s133 = sphi 0, %s119
      %s137 = sphi 0, %s137
      %s139 = sphi 0, %s137
      %s140 = sphi 0, %s139
      %s154 = sphi 0, %s140
      %s158 = sphi 0, %s158
      %s160 = sphi 0, %s158
      %s161 = sphi 0, %s160
      %s175 = sphi 0, %s161
      %s179 = sphi 0, %s179
      %s181 = sphi 0, %s179
      %s182 = sphi 0, %s181
      %s196 = sphi 0, %s182
      %s200 = sphi 0, %s200
      %s202 = sphi 0, %s200
      %s203 = sphi 0, %s202
      %s217 = sphi 0, %s203
      %s223 = sphi 0, %s225
      %s226 = sphi 0, %s223
      %s227 = sphi 0, %s226
      %s243 = sphi 0, %s227
    $region4: #{tpu_custom_call.1} parent=1 // loop_header_branch
      %22 = sbr.rel (%p20) target = $region8
    $region5: #{tpu_custom_call.1} parent=1 // loop_body
      %s24 = ssub.s32 %s19, 1
      %s25 = ssub.s32 %s19, 2
      %s26 = sadd.s32 %s19, 1
      %s27 = ssub.s32 %s19, %s26
      %p28 = scmp.eq.s32.totalorder %s27, 0
      %s30 = sadd.s32 %s29, 1
      %s31 = scalar_select %p28, %s29, %s30
      %p34 = pneg %p28
      %p35 = scmp.eq.s32.totalorder %s19, 1
      %p36 = por %p34, %p35
      %p37 = scmp.ne.s32.totalorder %s29, %s32
      %p38 = scmp.eq.s32.totalorder %s19, 0
      %p39 = por %p37, %p38
      %p40 = scmp.ne.s32.totalorder %s29, %s32
      %p41 = scmp.eq.s32.totalorder %s24, 1
      %p42 = por %p40, %p41
      %p43 = scmp.ne.s32.totalorder %s32, %s33
      %p44 = scmp.eq.s32.totalorder %s24, 0
      %p45 = por %p43, %p44
      %p46 = scmp.ne.s32.totalorder %s32, %s33
      %p47 = scmp.eq.s32.totalorder %s25, 1
      %p48 = por %p46, %p47
      %p50 = scmp.ne.s32.totalorder %s33, %s49
      %p51 = scmp.eq.s32.totalorder %s25, 0
      %p52 = por %p50, %p51
      %s54 = sadd.s32 %s53, 1
      %p57 = scmp.eq.s32.totalorder %s19, 1
      %p58 = scmp.ne.s32.totalorder %s53, %s55
      %p59 = scmp.eq.s32.totalorder %s19, 0
      %p60 = por %p58, %p59
      %p61 = scmp.ne.s32.totalorder %s53, %s55
      %p62 = scmp.eq.s32.totalorder %s24, 1
      %p63 = por %p61, %p62
      %p64 = scmp.ne.s32.totalorder %s55, %s56
      %p65 = scmp.eq.s32.totalorder %s24, 0
      %p66 = por %p64, %p65
      %p67 = scmp.ne.s32.totalorder %s55, %s56
      %p68 = scmp.eq.s32.totalorder %s25, 1
      %p69 = por %p67, %p68
      %p71 = scmp.ne.s32.totalorder %s56, %s70
      %p72 = scmp.eq.s32.totalorder %s25, 0
      %p73 = por %p71, %p72
      %s75 = sadd.s32 %s74, 1
      %p78 = scmp.eq.s32.totalorder %s19, 1
      %p79 = scmp.ne.s32.totalorder %s74, %s76
      %p80 = scmp.eq.s32.totalorder %s19, 0
      %p81 = por %p79, %p80
      %p82 = scmp.ne.s32.totalorder %s74, %s76
      %p83 = scmp.eq.s32.totalorder %s24, 1
      %p84 = por %p82, %p83
      %p85 = scmp.ne.s32.totalorder %s76, %s77
      %p86 = scmp.eq.s32.totalorder %s24, 0
      %p87 = por %p85, %p86
      %p88 = scmp.ne.s32.totalorder %s76, %s77
      %p89 = scmp.eq.s32.totalorder %s25, 1
      %p90 = por %p88, %p89
      %p92 = scmp.ne.s32.totalorder %s77, %s91
      %p93 = scmp.eq.s32.totalorder %s25, 0
      %p94 = por %p92, %p93
      %s96 = sadd.s32 %s95, 1
      %p99 = scmp.eq.s32.totalorder %s19, 1
      %p100 = scmp.ne.s32.totalorder %s95, %s97
      %p101 = scmp.eq.s32.totalorder %s19, 0
      %p102 = por %p100, %p101
      %p103 = scmp.ne.s32.totalorder %s95, %s97
      %p104 = scmp.eq.s32.totalorder %s24, 1
      %p105 = por %p103, %p104
      %p106 = scmp.ne.s32.totalorder %s97, %s98
      %p107 = scmp.eq.s32.totalorder %s24, 0
      %p108 = por %p106, %p107
      %p109 = scmp.ne.s32.totalorder %s97, %s98
      %p110 = scmp.eq.s32.totalorder %s25, 1
      %p111 = por %p109, %p110
      %p113 = scmp.ne.s32.totalorder %s98, %s112
      %p114 = scmp.eq.s32.totalorder %s25, 0
      %p115 = por %p113, %p114
      %s117 = sadd.s32 %s116, 1
      %p120 = scmp.eq.s32.totalorder %s19, 1
      %p121 = scmp.ne.s32.totalorder %s116, %s118
      %p122 = scmp.eq.s32.totalorder %s19, 0
      %p123 = por %p121, %p122
      %p124 = scmp.ne.s32.totalorder %s116, %s118
      %p125 = scmp.eq.s32.totalorder %s24, 1
      %p126 = por %p124, %p125
      %p127 = scmp.ne.s32.totalorder %s118, %s119
      %p128 = scmp.eq.s32.totalorder %s24, 0
      %p129 = por %p127, %p128
      %p130 = scmp.ne.s32.totalorder %s118, %s119
      %p131 = scmp.eq.s32.totalorder %s25, 1
      %p132 = por %p130, %p131
      %p134 = scmp.ne.s32.totalorder %s119, %s133
      %p135 = scmp.eq.s32.totalorder %s25, 0
      %p136 = por %p134, %p135
      %s138 = sadd.s32 %s137, 1
      %p141 = scmp.eq.s32.totalorder %s19, 1
      %p142 = scmp.ne.s32.totalorder %s137, %s139
      %p143 = scmp.eq.s32.totalorder %s19, 0
      %p144 = por %p142, %p143
      %p145 = scmp.ne.s32.totalorder %s137, %s139
      %p146 = scmp.eq.s32.totalorder %s24, 1
      %p147 = por %p145, %p146
      %p148 = scmp.ne.s32.totalorder %s139, %s140
      %p149 = scmp.eq.s32.totalorder %s24, 0
      %p150 = por %p148, %p149
      %p151 = scmp.ne.s32.totalorder %s139, %s140
      %p152 = scmp.eq.s32.totalorder %s25, 1
      %p153 = por %p151, %p152
      %p155 = scmp.ne.s32.totalorder %s140, %s154
      %p156 = scmp.eq.s32.totalorder %s25, 0
      %p157 = por %p155, %p156
      %s159 = sadd.s32 %s158, 1
      %p162 = scmp.eq.s32.totalorder %s19, 1
      %p163 = scmp.ne.s32.totalorder %s158, %s160
      %p164 = scmp.eq.s32.totalorder %s19, 0
      %p165 = por %p163, %p164
      %p166 = scmp.ne.s32.totalorder %s158, %s160
      %p167 = scmp.eq.s32.totalorder %s24, 1
      %p168 = por %p166, %p167
      %p169 = scmp.ne.s32.totalorder %s160, %s161
      %p170 = scmp.eq.s32.totalorder %s24, 0
      %p171 = por %p169, %p170
      %p172 = scmp.ne.s32.totalorder %s160, %s161
      %p173 = scmp.eq.s32.totalorder %s25, 1
      %p174 = por %p172, %p173
      %p176 = scmp.ne.s32.totalorder %s161, %s175
      %p177 = scmp.eq.s32.totalorder %s25, 0
      %p178 = por %p176, %p177
      %s180 = sadd.s32 %s179, 1
      %p183 = scmp.eq.s32.totalorder %s19, 1
      %p184 = scmp.ne.s32.totalorder %s179, %s181
      %p185 = scmp.eq.s32.totalorder %s19, 0
      %p186 = por %p184, %p185
      %p187 = scmp.ne.s32.totalorder %s179, %s181
      %p188 = scmp.eq.s32.totalorder %s24, 1
      %p189 = por %p187, %p188
      %p190 = scmp.ne.s32.totalorder %s181, %s182
      %p191 = scmp.eq.s32.totalorder %s24, 0
      %p192 = por %p190, %p191
      %p193 = scmp.ne.s32.totalorder %s181, %s182
      %p194 = scmp.eq.s32.totalorder %s25, 1
      %p195 = por %p193, %p194
      %p197 = scmp.ne.s32.totalorder %s182, %s196
      %p198 = scmp.eq.s32.totalorder %s25, 0
      %p199 = por %p197, %p198
      %s201 = sadd.s32 %s200, 1
      %p204 = scmp.eq.s32.totalorder %s19, 1
      %p205 = scmp.ne.s32.totalorder %s200, %s202
      %p206 = scmp.eq.s32.totalorder %s19, 0
      %p207 = por %p205, %p206
      %p208 = scmp.ne.s32.totalorder %s200, %s202
      %p209 = scmp.eq.s32.totalorder %s24, 1
      %p210 = por %p208, %p209
      %p211 = scmp.ne.s32.totalorder %s202, %s203
      %p212 = scmp.eq.s32.totalorder %s24, 0
      %p213 = por %p211, %p212
      %p214 = scmp.ne.s32.totalorder %s202, %s203
      %p215 = scmp.eq.s32.totalorder %s25, 1
      %p216 = por %p214, %p215
      %p218 = scmp.ne.s32.totalorder %s203, %s217
      %p219 = scmp.eq.s32.totalorder %s25, 0
      %p220 = por %p218, %p219
      %s221 = ssub.s32 %s19, %s26
      %p222 = scmp.eq.s32.totalorder %s221, 0
      %s224 = sadd.s32 %s223, 1
      %s225 = scalar_select %p222, %s223, %s224
      %p228 = pneg %p222
      %p229 = scmp.eq.s32.totalorder %s19, 1
      %p230 = por %p228, %p229
      %p231 = scmp.ne.s32.totalorder %s223, %s226
      %p232 = scmp.eq.s32.totalorder %s19, 0
      %p233 = por %p231, %p232
      %p234 = scmp.ne.s32.totalorder %s223, %s226
      %p235 = scmp.eq.s32.totalorder %s24, 1
      %p236 = por %p234, %p235
      %p237 = scmp.ne.s32.totalorder %s226, %s227
      %p238 = scmp.eq.s32.totalorder %s24, 0
      %p239 = por %p237, %p238
      %p240 = scmp.ne.s32.totalorder %s226, %s227
      %p241 = scmp.eq.s32.totalorder %s25, 1
      %p242 = por %p240, %p241
      %p244 = scmp.ne.s32.totalorder %s227, %s243
      %p245 = scmp.eq.s32.totalorder %s25, 0
      %p246 = por %p244, %p245
      %p247 = scmp.le.s32.totalorder 1, %s19
      %p248 = scmp.lt.s32.totalorder %s19, 3
      %p249 = pnand %p247, %p248
      %p250 = pneg %p249
      // Predicated region
      $region9: #{tpu_custom_call.1} parent=5 // pred_check
        _
      $region10: #{tpu_custom_call.1} parent=5 // pred_check_branch
        %252 = sbr.rel (%p249) target = $region12
      $region11: #{tpu_custom_call.1} parent=5 // pred_region
        %s253 = ssub.s32 %s19, 1
        // Predicated region
        $region13: #{tpu_custom_call.1} parent=11 // pred_check
          %p254 = pneg %p66
        $region14: #{tpu_custom_call.1} parent=11 // pred_check_branch
          %256 = sbr.rel (%p254) target = $region16
        $region15: #{tpu_custom_call.1} parent=11 // pred_region
          _
        $region16: #{tpu_custom_call.1} parent=11 // pred_fallthru
          _
        // Predicated region
        $region17: #{tpu_custom_call.1} parent=11 // pred_check
          %p257 = pneg %p87
        $region18: #{tpu_custom_call.1} parent=11 // pred_check_branch
          %259 = sbr.rel (%p257) target = $region20
        $region19: #{tpu_custom_call.1} parent=11 // pred_region
          _
        $region20: #{tpu_custom_call.1} parent=11 // pred_fallthru
          _
        // Predicated region
        $region21: #{tpu_custom_call.1} parent=11 // pred_check
          %p260 = pneg %p108
        $region22: #{tpu_custom_call.1} parent=11 // pred_check_branch
          %262 = sbr.rel (%p260) target = $region24
        $region23: #{tpu_custom_call.1} parent=11 // pred_region
          _
        $region24: #{tpu_custom_call.1} parent=11 // pred_fallthru
          _
        // Predicated region
        $region25: #{tpu_custom_call.1} parent=11 // pred_check
          %p263 = pneg %p129
        $region26: #{tpu_custom_call.1} parent=11 // pred_check_branch
          %265 = sbr.rel (%p263) target = $region28
        $region27: #{tpu_custom_call.1} parent=11 // pred_region
          _
        $region28: #{tpu_custom_call.1} parent=11 // pred_fallthru
          _
        // Predicated region
        $region29: #{tpu_custom_call.1} parent=11 // pred_check
          %p266 = pneg %p150
        $region30: #{tpu_custom_call.1} parent=11 // pred_check_branch
          %268 = sbr.rel (%p266) target = $region32
        $region31: #{tpu_custom_call.1} parent=11 // pred_region
          _
        $region32: #{tpu_custom_call.1} parent=11 // pred_fallthru
          _
        // Predicated region
        $region33: #{tpu_custom_call.1} parent=11 // pred_check
          %p269 = pneg %p171
        $region34: #{tpu_custom_call.1} parent=11 // pred_check_branch
          %271 = sbr.rel (%p269) target = $region36
        $region35: #{tpu_custom_call.1} parent=11 // pred_region
          _
        $region36: #{tpu_custom_call.1} parent=11 // pred_fallthru
          _
        // Predicated region
        $region37: #{tpu_custom_call.1} parent=11 // pred_check
          %p272 = pneg %p192
        $region38: #{tpu_custom_call.1} parent=11 // pred_check_branch
          %274 = sbr.rel (%p272) target = $region40
        $region39: #{tpu_custom_call.1} parent=11 // pred_region
          _
        $region40: #{tpu_custom_call.1} parent=11 // pred_fallthru
          _
        // Predicated region
        $region41: #{tpu_custom_call.1} parent=11 // pred_check
          %p275 = pneg %p213
        $region42: #{tpu_custom_call.1} parent=11 // pred_check_branch
          %277 = sbr.rel (%p275) target = $region44
        $region43: #{tpu_custom_call.1} parent=11 // pred_region
          _
        $region44: #{tpu_custom_call.1} parent=11 // pred_fallthru
          _
      $region12: #{tpu_custom_call.1} parent=5 // pred_fallthru
        _
      %p278 = scmp.lt.s32.totalorder %s19, 2
      // Predicated region
      $region45: #{tpu_custom_call.1} parent=5 // pred_check
        %p279 = pneg %p278
      $region46: #{tpu_custom_call.1} parent=5 // pred_check_branch
        %281 = sbr.rel (%p279) target = $region48
      $region47: #{tpu_custom_call.1} parent=5 // pred_region
        // Predicated region
        $region49: #{tpu_custom_call.1} parent=47 // pred_check
          %p282 = pneg %p39
        $region50: #{tpu_custom_call.1} parent=47 // pred_check_branch
          %284 = sbr.rel (%p282) target = $region52
        $region51: #{tpu_custom_call.1} parent=47 // pred_region
          %s285 = smul.u32 32, %s19
          %p286 = scmp.lt.s32.totalorder %s285, 63
          %s287 = scalar_select %p286, %s285, 63
          %s288 = smul.addr %s287, 8
          %s289 = scalar_lea.vmem %s0, %s288
          %s290 = smul.u32 32, %s19
        $region52: #{tpu_custom_call.1} parent=47 // pred_fallthru
          _
      $region48: #{tpu_custom_call.1} parent=5 // pred_fallthru
        _
      %p291 = scmp.le.s32.totalorder 1, %s19
      %p292 = scmp.lt.s32.totalorder %s19, 3
      %p293 = pnand %p291, %p292
      %p294 = pneg %p293
      // Predicated region
      $region53: #{tpu_custom_call.1} parent=5 // pred_check
        _
      $region54: #{tpu_custom_call.1} parent=5 // pred_check_branch
        %296 = sbr.rel (%p293) target = $region56
      $region55: #{tpu_custom_call.1} parent=5 // pred_region
        %s297 = ssub.s32 %s19, 1
        %s298 = smul.u32 32, %s24
        %p299 = scmp.lt.s32.totalorder %s298, 63
        %s300 = scalar_select %p299, %s298, 63
        %s301 = smul.addr %s300, 8
        %s302 = scalar_lea.vmem %s0, %s301
        %p303 = pneg %p45
        %p304 = pneg %p42
        %p305 = pneg %p66
        %p306 = pneg %p63
        %p307 = pneg %p87
        %p308 = pneg %p84
        %p309 = pneg %p108
        %p310 = pneg %p105
        %p311 = pneg %p129
        %p312 = pneg %p126
        %p313 = pneg %p150
        %p314 = pneg %p147
        %p315 = pneg %p171
        %p316 = pneg %p168
        %p317 = pneg %p192
        %p318 = pneg %p189
        %p319 = pneg %p213
        %p320 = pneg %p210
        %p321 = pneg %p239
        %p322 = pneg %p236
        %s323 = sand.u32 %s226, 1
        %s324 = scalar_lea.sflag [#allocation4], %s323
        %s325 = sand.u32 %s226, 1
        %s326 = smul.addr %s325, 2
        %s327 = scalar_lea.vmem [#allocation3], %s326
        %s328 = smul.u32 32, %s24
        %p329 = scmp.lt.s32.totalorder %s328, 63
        %s330 = scalar_select %p329, %s328, 63
        %s331 = smul.addr %s330, 8
        %s332 = scalar_lea.vmem %s0, %s331
        %s333 = smul.u32 32, %s24
        %s334 = smul.u32 2, %s24
        %v336 = vld [vmem:[%s332] sm:$0xff]
        %v337 = vld [vmem:[%s332 + $0x8] sm:$0xff]
        %v338 = vld [vmem:[%s332 + $0x10] sm:$0xff]
        %v339 = vld [vmem:[%s332 + $0x18] sm:$0xff]
        %v340 = vld [vmem:[%s332 + $0x20] sm:$0xff]
        %v341 = vld [vmem:[%s332 + $0x28] sm:$0xff]
        %v342 = vld [vmem:[%s332 + $0x30] sm:$0xff]
        %v343 = vld [vmem:[%s332 + $0x38] sm:$0xff]
        %v344 = vld [vmem:[%s332 + $0x40] sm:$0xff]
        %v345 = vld [vmem:[%s332 + $0x48] sm:$0xff]
        %v346 = vld [vmem:[%s332 + $0x50] sm:$0xff]
        %v347 = vld [vmem:[%s332 + $0x58] sm:$0xff]
        %v348 = vld [vmem:[%s332 + $0x60] sm:$0xff]
        %v349 = vld [vmem:[%s332 + $0x68] sm:$0xff]
        %v350 = vld [vmem:[%s332 + $0x70] sm:$0xff]
        %v351 = vld [vmem:[%s332 + $0x78] sm:$0xff]
        %v352 = vld [vmem:[%s332 + $0x80] sm:$0xff]
        %v353 = vld [vmem:[%s332 + $0x88] sm:$0xff]
        %v354 = vld [vmem:[%s332 + $0x90] sm:$0xff]
        %v355 = vld [vmem:[%s332 + $0x98] sm:$0xff]
        %v356 = vld [vmem:[%s332 + $0xa0] sm:$0xff]
        %v357 = vld [vmem:[%s332 + $0xa8] sm:$0xff]
        %v358 = vld [vmem:[%s332 + $0xb0] sm:$0xff]
        %v359 = vld [vmem:[%s332 + $0xb8] sm:$0xff]
        %v360 = vld [vmem:[%s332 + $0xc0] sm:$0xff]
        %v361 = vld [vmem:[%s332 + $0xc8] sm:$0xff]
        %v362 = vld [vmem:[%s332 + $0xd0] sm:$0xff]
        %v363 = vld [vmem:[%s332 + $0xd8] sm:$0xff]
        %v364 = vld [vmem:[%s332 + $0xe0] sm:$0xff]
        %v365 = vld [vmem:[%s332 + $0xe8] sm:$0xff]
        %v366 = vld [vmem:[%s332 + $0xf0] sm:$0xff]
        %v367 = vld [vmem:[%s332 + $0xf8] sm:$0xff]
        %v368 = vpack.c.bf16 %v337, %v336
        %v369 = vpack.c.bf16 %v339, %v338
        %v370 = vpack.c.bf16 %v341, %v340
        %v371 = vpack.c.bf16 %v343, %v342
        %v372 = vpack.c.bf16 %v345, %v344
        %v373 = vpack.c.bf16 %v347, %v346
        %v374 = vpack.c.bf16 %v349, %v348
        %v375 = vpack.c.bf16 %v351, %v350
        %v376 = vpack.c.bf16 %v353, %v352
        %v377 = vpack.c.bf16 %v355, %v354
        %v378 = vpack.c.bf16 %v357, %v356
        %v379 = vpack.c.bf16 %v359, %v358
        %v380 = vpack.c.bf16 %v361, %v360
        %v381 = vpack.c.bf16 %v363, %v362
        %v382 = vpack.c.bf16 %v365, %v364
        %v383 = vpack.c.bf16 %v367, %v366
        %v384 = vld [vmem:[%s1] sm:$0xf]
        %v385 = vld [vmem:[%s1 + $0x4] sm:$0xf]
        %v386 = vld [vmem:[%s1 + $0x8] sm:$0xf]
        %v387 = vld [vmem:[%s1 + $0xc] sm:$0xf]
        %v388 = vld [vmem:[%s1 + $0x10] sm:$0xf]
        %v389 = vld [vmem:[%s1 + $0x14] sm:$0xf]
        %v390 = vld [vmem:[%s1 + $0x18] sm:$0xf]
        %v391 = vld [vmem:[%s1 + $0x1c] sm:$0xf]
        %v392 = vld [vmem:[%s1 + $0x20] sm:$0xf]
        %v393 = vld [vmem:[%s1 + $0x24] sm:$0xf]
        %v394 = vld [vmem:[%s1 + $0x28] sm:$0x1]
        %v395 = vld [vmem:[%s2] sm:$0xff]
        %v396 = vld [vmem:[%s2 + $0x8] sm:$0xff]
        %v397 = vld [vmem:[%s2 + $0x10] sm:$0xff]
        %v398 = vld [vmem:[%s2 + $0x18] sm:$0xff]
        %v399 = vld [vmem:[%s2 + $0x20] sm:$0xff]
        %v400 = vld [vmem:[%s2 + $0x28] sm:$0xff]
        %v401 = vld [vmem:[%s2 + $0x30] sm:$0xff]
        %v402 = vld [vmem:[%s2 + $0x38] sm:$0xff]
        %v403 = vld [vmem:[%s2 + $0x40] sm:$0xff]
        %v404 = vld [vmem:[%s2 + $0x48] sm:$0xff]
        %v405 = vld [vmem:[%s2 + $0x50] sm:$0x1]
        %407 = vset.pattern.permute.xlu0 0
        %408 = vperm.xlu0 %407, %v395
        %v409 = vpop.permute.xlu0 %408
        %412 = vset.pattern.permute.xlu0 0
        %413 = vperm.xlu0 %412, %v396
        %v414 = vpop.permute.xlu0 %413
        %417 = vset.pattern.permute.xlu0 0
        %418 = vperm.xlu0 %417, %v397
        %v419 = vpop.permute.xlu0 %418
        %422 = vset.pattern.permute.xlu0 0
        %423 = vperm.xlu0 %422, %v398
        %v424 = vpop.permute.xlu0 %423
        %427 = vset.pattern.permute.xlu0 0
        %428 = vperm.xlu0 %427, %v399
        %v429 = vpop.permute.xlu0 %428
        %432 = vset.pattern.permute.xlu0 0
        %433 = vperm.xlu0 %432, %v400
        %v434 = vpop.permute.xlu0 %433
        %437 = vset.pattern.permute.xlu0 0
        %438 = vperm.xlu0 %437, %v401
        %v439 = vpop.permute.xlu0 %438
        %442 = vset.pattern.permute.xlu0 0
        %443 = vperm.xlu0 %442, %v402
        %v444 = vpop.permute.xlu0 %443
        %447 = vset.pattern.permute.xlu0 0
        %448 = vperm.xlu0 %447, %v403
        %v449 = vpop.permute.xlu0 %448
        %452 = vset.pattern.permute.xlu0 0
        %453 = vperm.xlu0 %452, %v404
        %v454 = vpop.permute.xlu0 %453
        %457 = vset.pattern.permute.xlu0 0
        %458 = vperm.xlu0 %457, %v405
        %v459 = vpop.permute.xlu0 %458
        %v472 = vunpack.c.l.b16 %v384
        %v473 = vunpack.c.l.b16 %v385
        %v474 = vunpack.c.l.b16 %v386
        %v475 = vunpack.c.l.b16 %v387
        %v476 = vunpack.c.l.b16 %v388
        %v477 = vunpack.c.l.b16 %v389
        %v478 = vunpack.c.l.b16 %v390
        %v479 = vunpack.c.l.b16 %v391
        %v480 = vunpack.c.l.b16 %v392
        %v481 = vunpack.c.l.b16 %v393
        %v482 = vunpack.c.l.b16 %v394
        %v483 = vpack.c.b16 %v473, %v472
        %v484 = vpack.c.b16 %v475, %v474
        %v485 = vpack.c.b16 %v477, %v476
        %v486 = vpack.c.b16 %v479, %v478
        %v487 = vpack.c.b16 %v481, %v480
        %v488 = vpack.c.b16 %v482, %v482
        %vm489 = vcmask 72704
        %v491 = vsel %vm489, %v483, 0
        %v494 = vsel %vm489, %v484, 0
        %v497 = vsel %vm489, %v485, 0
        %v500 = vsel %vm489, %v486, 0
        %v503 = vsel %vm489, %v487, 0
        %v506 = vsel %vm489, %v488, 0
        %v509 = vsel %vm489, %v368, 0
        %v512 = vsel %vm489, %v369, 0
        %v515 = vsel %vm489, %v370, 0
        %v518 = vsel %vm489, %v371, 0
        %v521 = vsel %vm489, %v372, 0
        %v524 = vsel %vm489, %v373, 0
        %v527 = vsel %vm489, %v374, 0
        %v530 = vsel %vm489, %v375, 0
        %v533 = vsel %vm489, %v376, 0
        %v536 = vsel %vm489, %v377, 0
        %v539 = vsel %vm489, %v378, 0
        %v542 = vsel %vm489, %v379, 0
        %v545 = vsel %vm489, %v380, 0
        %v548 = vsel %vm489, %v381, 0
        %v551 = vsel %vm489, %v382, 0
        %v554 = vsel %vm489, %v383, 0
        %556 = vmatprep.subr.bf16.mxu0 0
        %557 = vmatpush1.bf16.xpose.msra.mxu0 %v530
        %558 = vmatprep.subr.bf16.mxu0 0
        %559 = vmatpush1.bf16.xpose.msra.mxu0 %v527
        %560 = vmatprep.subr.bf16.mxu0 0
        %561 = vmatpush1.bf16.xpose.msra.mxu0 %v524
        %562 = vmatprep.subr.bf16.mxu0 0
        %563 = vmatpush1.bf16.xpose.msra.mxu0 %v521
        %564 = vmatprep.subr.bf16.mxu0 0
        %565 = vmatpush1.bf16.xpose.msra.mxu0 %v518
        %566 = vmatprep.subr.bf16.mxu0 0
        %567 = vmatpush1.bf16.xpose.msra.mxu0 %v515
        %568 = vmatprep.subr.bf16.mxu0 0
        %569 = vmatpush1.bf16.xpose.msra.mxu0 %v512
        %570 = vmatprep.subr.bf16.mxu0 0
        %571 = vmatpush1.bf16.xpose.msra.mxu0 %v509
        %572 = vmatprep.subr.bf16.mxu0 0
        %573 = vmatpush2.bf16.xpose.msra.mxu0 %v554
        %574 = vmatprep.subr.bf16.mxu0 0
        %575 = vmatpush2.bf16.xpose.msra.mxu0 %v551
        %576 = vmatprep.subr.bf16.mxu0 0
        %577 = vmatpush2.bf16.xpose.msra.mxu0 %v548
        %578 = vmatprep.subr.bf16.mxu0 0
        %579 = vmatpush2.bf16.xpose.msra.mxu0 %v545
        %580 = vmatprep.subr.bf16.mxu0 0
        %581 = vmatpush2.bf16.xpose.msra.mxu0 %v542
        %582 = vmatprep.subr.bf16.mxu0 0
        %583 = vmatpush2.bf16.xpose.msra.mxu0 %v539
        %584 = vmatprep.subr.bf16.mxu0 0
        %585 = vmatpush2.bf16.xpose.msra.mxu0 %v536
        %586 = vmatprep.subr.bf16.mxu0 0
        %587 = vmatpush2.bf16.xpose.msra.mxu0 %v533
        %588 = vmatprep.mubr.bf16.mxu0 0
        %589 = vmatmul.mubr.bf16.gmra.mxu0 %v491
        %v590 = vpop.f32.mrf.mxu0
        %v591 = vadd.f32 %v409, %v590
        %v592 = vpop.f32.mrf.mxu0
        %v593 = vadd.f32 %v409, %v592
        %v594 = vpop.f32.mrf.mxu0
        %v595 = vadd.f32 %v414, %v594
        %v596 = vpop.f32.mrf.mxu0
        %v597 = vadd.f32 %v414, %v596
        %598 = vmatprep.mubr.bf16.mxu0 0
        %599 = vmatmul.mubr.bf16.gmra.mxu0 %v494
        %v600 = vpop.f32.mrf.mxu0
        %v601 = vadd.f32 %v419, %v600
        %v602 = vpop.f32.mrf.mxu0
        %v603 = vadd.f32 %v419, %v602
        %v604 = vpop.f32.mrf.mxu0
        %v605 = vadd.f32 %v424, %v604
        %v606 = vpop.f32.mrf.mxu0
        %v607 = vadd.f32 %v424, %v606
        %608 = vmatprep.mubr.bf16.mxu0 0
        %609 = vmatmul.mubr.bf16.gmra.mxu0 %v497
        %v610 = vpop.f32.mrf.mxu0
        %v611 = vadd.f32 %v429, %v610
        %v612 = vpop.f32.mrf.mxu0
        %v613 = vadd.f32 %v429, %v612
        %v614 = vpop.f32.mrf.mxu0
        %v615 = vadd.f32 %v434, %v614
        %v616 = vpop.f32.mrf.mxu0
        %v617 = vadd.f32 %v434, %v616
        %618 = vmatprep.mubr.bf16.mxu0 0
        %619 = vmatmul.mubr.bf16.gmra.mxu0 %v500
        %v620 = vpop.f32.mrf.mxu0
        %v621 = vadd.f32 %v439, %v620
        %v622 = vpop.f32.mrf.mxu0
        %v623 = vadd.f32 %v439, %v622
        %v624 = vpop.f32.mrf.mxu0
        %v625 = vadd.f32 %v444, %v624
        %v626 = vpop.f32.mrf.mxu0
        %v627 = vadd.f32 %v444, %v626
        %628 = vmatprep.mubr.bf16.mxu0 0
        %629 = vmatmul.mubr.bf16.gmra.mxu0 %v503
        %v630 = vpop.f32.mrf.mxu0
        %v631 = vadd.f32 %v449, %v630
        %v632 = vpop.f32.mrf.mxu0
        %v633 = vadd.f32 %v449, %v632
        %v634 = vpop.f32.mrf.mxu0
        %v635 = vadd.f32 %v454, %v634
        %v636 = vpop.f32.mrf.mxu0
        %v637 = vadd.f32 %v454, %v636
        %638 = vmatprep.mubr.bf16.mxu0 0
        %639 = vmatmul.mubr.bf16.gmra.mxu0 %v506
        %v640 = vpop.f32.mrf.mxu0
        %v641 = vadd.f32 %v459, %v640
        %v642 = vpop.f32.mrf.mxu0
        %v643 = vadd.f32 %v459, %v642
        %v644 = vpop.f32.mrf.mxu0
        %v645 = vpop.f32.mrf.mxu0
        %646 = vdwg.mxu0
        %v647 = vmul.f32 %v591, 0.01
        %v648 = vmul.f32 %v593, 0.01
        %v649 = vmul.f32 %v595, 0.01
        %v650 = vmul.f32 %v597, 0.01
        %v651 = vmul.f32 %v601, 0.01
        %v652 = vmul.f32 %v603, 0.01
        %v653 = vmul.f32 %v605, 0.01
        %v654 = vmul.f32 %v607, 0.01
        %v655 = vmul.f32 %v611, 0.01
        %v656 = vmul.f32 %v613, 0.01
        %v657 = vmul.f32 %v615, 0.01
        %v658 = vmul.f32 %v617, 0.01
        %v659 = vmul.f32 %v621, 0.01
        %v660 = vmul.f32 %v623, 0.01
        %v661 = vmul.f32 %v625, 0.01
        %v662 = vmul.f32 %v627, 0.01
        %v663 = vmul.f32 %v631, 0.01
        %v664 = vmul.f32 %v633, 0.01
        %v665 = vmul.f32 %v635, 0.01
        %v666 = vmul.f32 %v637, 0.01
        %v667 = vmul.f32 %v641, 0.01
        %v668 = vmul.f32 %v643, 0.01
        %v669 = vmax.f32 %v591, %v647
        %v670 = vmax.f32 %v593, %v648
        %v671 = vmax.f32 %v595, %v649
        %v672 = vmax.f32 %v597, %v650
        %v673 = vmax.f32 %v601, %v651
        %v674 = vmax.f32 %v603, %v652
        %v675 = vmax.f32 %v605, %v653
        %v676 = vmax.f32 %v607, %v654
        %v677 = vmax.f32 %v611, %v655
        %v678 = vmax.f32 %v613, %v656
        %v679 = vmax.f32 %v615, %v657
        %v680 = vmax.f32 %v617, %v658
        %v681 = vmax.f32 %v621, %v659
        %v682 = vmax.f32 %v623, %v660
        %v683 = vmax.f32 %v625, %v661
        %v684 = vmax.f32 %v627, %v662
        %v685 = vmax.f32 %v631, %v663
        %v686 = vmax.f32 %v633, %v664
        %v687 = vmax.f32 %v635, %v665
        %v688 = vmax.f32 %v637, %v666
        %v689 = vmax.f32 %v641, %v667
        %v690 = vmax.f32 %v643, %v668
        %v691 = vpack.c.bf16 %v671, %v669
        %v692 = vpack.c.bf16 %v672, %v670
        %v693 = vpack.c.bf16 %v675, %v673
        %v694 = vpack.c.bf16 %v676, %v674
        %v695 = vpack.c.bf16 %v679, %v677
        %v696 = vpack.c.bf16 %v680, %v678
        %v697 = vpack.c.bf16 %v683, %v681
        %v698 = vpack.c.bf16 %v684, %v682
        %v699 = vpack.c.bf16 %v687, %v685
        %v700 = vpack.c.bf16 %v688, %v686
        %v701 = vpack.c.bf16 %v689, %v689
        %v702 = vpack.c.bf16 %v690, %v690
        %v703 = vld [vmem:[%s3] sm:$0xf]
        %v704 = vld [vmem:[%s3 + $0x4] sm:$0xf]
        %v705 = vld [vmem:[%s3 + $0x8] sm:$0xf]
        %v706 = vld [vmem:[%s3 + $0xc] sm:$0xf]
        %v707 = vld [vmem:[%s3 + $0x10] sm:$0xf]
        %v708 = vld [vmem:[%s3 + $0x14] sm:$0xf]
        %v709 = vld [vmem:[%s3 + $0x18] sm:$0xf]
        %v710 = vld [vmem:[%s3 + $0x1c] sm:$0xf]
        %v711 = vld [vmem:[%s3 + $0x20] sm:$0xf]
        %v712 = vld [vmem:[%s3 + $0x24] sm:$0xf]
        %v713 = vld [vmem:[%s3 + $0x28] sm:$0x1]
        %v714 = vld [vmem:[%s4] sm:$0xff]
        %v715 = vld [vmem:[%s4 + $0x8] sm:$0xff]
        %v716 = vld [vmem:[%s4 + $0x10] sm:$0xff]
        %v717 = vld [vmem:[%s4 + $0x18] sm:$0xff]
        %v718 = vld [vmem:[%s4 + $0x20] sm:$0xff]
        %v719 = vld [vmem:[%s4 + $0x28] sm:$0xff]
        %v720 = vld [vmem:[%s4 + $0x30] sm:$0xff]
        %v721 = vld [vmem:[%s4 + $0x38] sm:$0xff]
        %v722 = vld [vmem:[%s4 + $0x40] sm:$0xff]
        %v723 = vld [vmem:[%s4 + $0x48] sm:$0xff]
        %v724 = vld [vmem:[%s4 + $0x50] sm:$0x1]
        %726 = vset.pattern.permute.xlu0 0
        %727 = vperm.xlu0 %726, %v714
        %v728 = vpop.permute.xlu0 %727
        %731 = vset.pattern.permute.xlu0 0
        %732 = vperm.xlu0 %731, %v715
        %v733 = vpop.permute.xlu0 %732
        %736 = vset.pattern.permute.xlu0 0
        %737 = vperm.xlu0 %736, %v716
        %v738 = vpop.permute.xlu0 %737
        %741 = vset.pattern.permute.xlu0 0
        %742 = vperm.xlu0 %741, %v717
        %v743 = vpop.permute.xlu0 %742
        %746 = vset.pattern.permute.xlu0 0
        %747 = vperm.xlu0 %746, %v718
        %v748 = vpop.permute.xlu0 %747
        %751 = vset.pattern.permute.xlu0 0
        %752 = vperm.xlu0 %751, %v719
        %v753 = vpop.permute.xlu0 %752
        %756 = vset.pattern.permute.xlu0 0
        %757 = vperm.xlu0 %756, %v720
        %v758 = vpop.permute.xlu0 %757
        %761 = vset.pattern.permute.xlu0 0
        %762 = vperm.xlu0 %761, %v721
        %v763 = vpop.permute.xlu0 %762
        %766 = vset.pattern.permute.xlu0 0
        %767 = vperm.xlu0 %766, %v722
        %v768 = vpop.permute.xlu0 %767
        %771 = vset.pattern.permute.xlu0 0
        %772 = vperm.xlu0 %771, %v723
        %v773 = vpop.permute.xlu0 %772
        %776 = vset.pattern.permute.xlu0 0
        %777 = vperm.xlu0 %776, %v724
        %v778 = vpop.permute.xlu0 %777
        %v791 = vunpack.c.l.b16 %v703
        %v792 = vunpack.c.l.b16 %v704
        %v793 = vunpack.c.l.b16 %v705
        %v794 = vunpack.c.l.b16 %v706
        %v795 = vunpack.c.l.b16 %v707
        %v796 = vunpack.c.l.b16 %v708
        %v797 = vunpack.c.l.b16 %v709
        %v798 = vunpack.c.l.b16 %v710
        %v799 = vunpack.c.l.b16 %v711
        %v800 = vunpack.c.l.b16 %v712
        %v801 = vunpack.c.l.b16 %v713
        %v802 = vpack.c.b16 %v792, %v791
        %v803 = vpack.c.b16 %v794, %v793
        %v804 = vpack.c.b16 %v796, %v795
        %v805 = vpack.c.b16 %v798, %v797
        %v806 = vpack.c.b16 %v800, %v799
        %v807 = vpack.c.b16 %v801, %v801
        %vm808 = vcmask 662528
        %v810 = vsel %vm808, %v802, 0
        %v813 = vsel %vm808, %v803, 0
        %v816 = vsel %vm808, %v804, 0
        %v819 = vsel %vm808, %v805, 0
        %v822 = vsel %vm808, %v806, 0
        %v825 = vsel %vm808, %v807, 0
        %vm827 = vcmask 1040384
        %v828 = vsel 0, 4294967295, 65535
        %v829 = vsel %vm827, %v828, 0
        %v831 = vand.u32 %v701, %v829
        %v834 = vand.u32 %v702, %v829
        %836 = vmatprep.subr.bf16.mxu0 0
        %837 = vmatpush1.bf16.msra.mxu0 0
        %838 = vmatprep.subr.bf16.mxu0 0
        %839 = vmatpush1.bf16.msra.mxu0 0
        %840 = vmatprep.subr.bf16.mxu0 %v834
        %841 = vmatpush1.bf16.msra.mxu0 %v831
        %842 = vmatprep.subr.bf16.mxu0 %v700
        %843 = vmatpush1.bf16.msra.mxu0 %v699
        %844 = vmatprep.subr.bf16.mxu0 %v698
        %845 = vmatpush1.bf16.msra.mxu0 %v697
        %846 = vmatprep.subr.bf16.mxu0 %v696
        %847 = vmatpush1.bf16.msra.mxu0 %v695
        %848 = vmatprep.subr.bf16.mxu0 %v694
        %849 = vmatpush1.bf16.msra.mxu0 %v693
        %850 = vmatprep.subr.bf16.mxu0 %v692
        %851 = vmatpush1.bf16.msra.mxu0 %v691
        %852 = vmatprep.subr.bf16.mxu0 0
        %853 = vmatpush2.bf16.msra.mxu0 0
        %854 = vmatprep.subr.bf16.mxu0 0
        %855 = vmatpush2.bf16.msra.mxu0 0
        %856 = vmatprep.subr.bf16.mxu0 0
        %857 = vmatpush2.bf16.msra.mxu0 0
        %858 = vmatprep.subr.bf16.mxu0 0
        %859 = vmatpush2.bf16.msra.mxu0 0
        %860 = vmatprep.subr.bf16.mxu0 0
        %861 = vmatpush2.bf16.msra.mxu0 0
        %862 = vmatprep.subr.bf16.mxu0 0
        %863 = vmatpush2.bf16.msra.mxu0 0
        %864 = vmatprep.subr.bf16.mxu0 0
        %865 = vmatpush2.bf16.msra.mxu0 0
        %866 = vmatprep.subr.bf16.mxu0 0
        %867 = vmatpush2.bf16.msra.mxu0 0
        %868 = vmatprep.mubr.bf16.mxu0 0
        %869 = vmatmul.mubr.bf16.gmra.mxu0 %v810
        %v870 = vpop.f32.mrf.mxu0
        %v871 = vadd.f32 %v728, %v870
        %v872 = vpop.f32.mrf.mxu0
        %v873 = vadd.f32 %v728, %v872
        %v874 = vpop.f32.mrf.mxu0
        %v875 = vadd.f32 %v733, %v874
        %v876 = vpop.f32.mrf.mxu0
        %v877 = vadd.f32 %v733, %v876
        %878 = vmatprep.mubr.bf16.mxu0 0
        %879 = vmatmul.mubr.bf16.gmra.mxu0 %v813
        %v880 = vpop.f32.mrf.mxu0
        %v881 = vadd.f32 %v738, %v880
        %v882 = vpop.f32.mrf.mxu0
        %v883 = vadd.f32 %v738, %v882
        %v884 = vpop.f32.mrf.mxu0
        %v885 = vadd.f32 %v743, %v884
        %v886 = vpop.f32.mrf.mxu0
        %v887 = vadd.f32 %v743, %v886
        %888 = vmatprep.mubr.bf16.mxu0 0
        %889 = vmatmul.mubr.bf16.gmra.mxu0 %v816
        %v890 = vpop.f32.mrf.mxu0
        %v891 = vadd.f32 %v748, %v890
        %v892 = vpop.f32.mrf.mxu0
        %v893 = vadd.f32 %v748, %v892
        %v894 = vpop.f32.mrf.mxu0
        %v895 = vadd.f32 %v753, %v894
        %v896 = vpop.f32.mrf.mxu0
        %v897 = vadd.f32 %v753, %v896
        %898 = vmatprep.mubr.bf16.mxu0 0
        %899 = vmatmul.mubr.bf16.gmra.mxu0 %v819
        %v900 = vpop.f32.mrf.mxu0
        %v901 = vadd.f32 %v758, %v900
        %v902 = vpop.f32.mrf.mxu0
        %v903 = vadd.f32 %v758, %v902
        %v904 = vpop.f32.mrf.mxu0
        %v905 = vadd.f32 %v763, %v904
        %v906 = vpop.f32.mrf.mxu0
        %v907 = vadd.f32 %v763, %v906
        %908 = vmatprep.mubr.bf16.mxu0 0
        %909 = vmatmul.mubr.bf16.gmra.mxu0 %v822
        %v910 = vpop.f32.mrf.mxu0
        %v911 = vadd.f32 %v768, %v910
        %v912 = vpop.f32.mrf.mxu0
        %v913 = vadd.f32 %v768, %v912
        %v914 = vpop.f32.mrf.mxu0
        %v915 = vadd.f32 %v773, %v914
        %v916 = vpop.f32.mrf.mxu0
        %v917 = vadd.f32 %v773, %v916
        %918 = vmatprep.mubr.bf16.mxu0 0
        %919 = vmatmul.mubr.bf16.gmra.mxu0 %v825
        %v920 = vpop.f32.mrf.mxu0
        %v921 = vadd.f32 %v778, %v920
        %v922 = vpop.f32.mrf.mxu0
        %v923 = vadd.f32 %v778, %v922
        %v924 = vpop.f32.mrf.mxu0
        %v925 = vpop.f32.mrf.mxu0
        %926 = vdwg.mxu0
        %v927 = vmul.f32 %v871, 0.01
        %v928 = vmul.f32 %v873, 0.01
        %v929 = vmul.f32 %v875, 0.01
        %v930 = vmul.f32 %v877, 0.01
        %v931 = vmul.f32 %v881, 0.01
        %v932 = vmul.f32 %v883, 0.01
        %v933 = vmul.f32 %v885, 0.01
        %v934 = vmul.f32 %v887, 0.01
        %v935 = vmul.f32 %v891, 0.01
        %v936 = vmul.f32 %v893, 0.01
        %v937 = vmul.f32 %v895, 0.01
        %v938 = vmul.f32 %v897, 0.01
        %v939 = vmul.f32 %v901, 0.01
        %v940 = vmul.f32 %v903, 0.01
        %v941 = vmul.f32 %v905, 0.01
        %v942 = vmul.f32 %v907, 0.01
        %v943 = vmul.f32 %v911, 0.01
        %v944 = vmul.f32 %v913, 0.01
        %v945 = vmul.f32 %v915, 0.01
        %v946 = vmul.f32 %v917, 0.01
        %v947 = vmul.f32 %v921, 0.01
        %v948 = vmul.f32 %v923, 0.01
        %v949 = vmax.f32 %v871, %v927
        %v950 = vmax.f32 %v873, %v928
        %v951 = vmax.f32 %v875, %v929
        %v952 = vmax.f32 %v877, %v930
        %v953 = vmax.f32 %v881, %v931
        %v954 = vmax.f32 %v883, %v932
        %v955 = vmax.f32 %v885, %v933
        %v956 = vmax.f32 %v887, %v934
        %v957 = vmax.f32 %v891, %v935
        %v958 = vmax.f32 %v893, %v936
        %v959 = vmax.f32 %v895, %v937
        %v960 = vmax.f32 %v897, %v938
        %v961 = vmax.f32 %v901, %v939
        %v962 = vmax.f32 %v903, %v940
        %v963 = vmax.f32 %v905, %v941
        %v964 = vmax.f32 %v907, %v942
        %v965 = vmax.f32 %v911, %v943
        %v966 = vmax.f32 %v913, %v944
        %v967 = vmax.f32 %v915, %v945
        %v968 = vmax.f32 %v917, %v946
        %v969 = vmax.f32 %v921, %v947
        %v970 = vmax.f32 %v923, %v948
        %v971 = vpack.c.bf16 %v951, %v949
        %v972 = vpack.c.bf16 %v952, %v950
        %v973 = vpack.c.bf16 %v955, %v953
        %v974 = vpack.c.bf16 %v956, %v954
        %v975 = vpack.c.bf16 %v959, %v957
        %v976 = vpack.c.bf16 %v960, %v958
        %v977 = vpack.c.bf16 %v963, %v961
        %v978 = vpack.c.bf16 %v964, %v962
        %v979 = vpack.c.bf16 %v967, %v965
        %v980 = vpack.c.bf16 %v968, %v966
        %v981 = vpack.c.bf16 %v969, %v969
        %v982 = vpack.c.bf16 %v970, %v970
        %v983 = vld [vmem:[%s5] sm:$0xf]
        %v984 = vld [vmem:[%s5 + $0x4] sm:$0x1]
        %v985 = vld [vmem:[%s6] sm:$0xff]
        %v986 = vld [vmem:[%s6 + $0x8] sm:$0x1]
        %988 = vset.pattern.permute.xlu0 0
        %989 = vperm.xlu0 %988, %v985
        %v990 = vpop.permute.xlu0 %989
        %993 = vset.pattern.permute.xlu0 0
        %994 = vperm.xlu0 %993, %v986
        %v995 = vpop.permute.xlu0 %994
        %v999 = vunpack.c.l.b16 %v983
        %v1000 = vunpack.c.l.b16 %v984
        %v1001 = vpack.c.b16 %v1000, %v999
        %v1003 = vsel %vm808, %v1001, 0
        %v1006 = vand.u32 %v981, %v829
        %v1009 = vand.u32 %v982, %v829
        %1011 = vmatprep.subr.bf16.mxu0 0
        %1012 = vmatpush1.bf16.msra.mxu0 0
        %1013 = vmatprep.subr.bf16.mxu0 0
        %1014 = vmatpush1.bf16.msra.mxu0 0
        %1015 = vmatprep.subr.bf16.mxu0 %v1009
        %1016 = vmatpush1.bf16.msra.mxu0 %v1006
        %1017 = vmatprep.subr.bf16.mxu0 %v980
        %1018 = vmatpush1.bf16.msra.mxu0 %v979
        %1019 = vmatprep.subr.bf16.mxu0 %v978
        %1020 = vmatpush1.bf16.msra.mxu0 %v977
        %1021 = vmatprep.subr.bf16.mxu0 %v976
        %1022 = vmatpush1.bf16.msra.mxu0 %v975
        %1023 = vmatprep.subr.bf16.mxu0 %v974
        %1024 = vmatpush1.bf16.msra.mxu0 %v973
        %1025 = vmatprep.subr.bf16.mxu0 %v972
        %1026 = vmatpush1.bf16.msra.mxu0 %v971
        %1027 = vmatprep.subr.bf16.mxu0 0
        %1028 = vmatpush2.bf16.msra.mxu0 0
        %1029 = vmatprep.subr.bf16.mxu0 0
        %1030 = vmatpush2.bf16.msra.mxu0 0
        %1031 = vmatprep.subr.bf16.mxu0 0
        %1032 = vmatpush2.bf16.msra.mxu0 0
        %1033 = vmatprep.subr.bf16.mxu0 0
        %1034 = vmatpush2.bf16.msra.mxu0 0
        %1035 = vmatprep.subr.bf16.mxu0 0
        %1036 = vmatpush2.bf16.msra.mxu0 0
        %1037 = vmatprep.subr.bf16.mxu0 0
        %1038 = vmatpush2.bf16.msra.mxu0 0
        %1039 = vmatprep.subr.bf16.mxu0 0
        %1040 = vmatpush2.bf16.msra.mxu0 0
        %1041 = vmatprep.subr.bf16.mxu0 0
        %1042 = vmatpush2.bf16.msra.mxu0 0
        %1043 = vmatprep.mubr.bf16.mxu0 0
        %1044 = vmatmul.mubr.bf16.gmra.mxu0 %v1003
        %v1045 = vpop.f32.mrf.mxu0
        %v1046 = vadd.f32 %v990, %v1045
        %v1047 = vpop.f32.mrf.mxu0
        %v1048 = vadd.f32 %v990, %v1047
        %v1049 = vpop.f32.mrf.mxu0
        %v1050 = vadd.f32 %v995, %v1049
        %v1051 = vpop.f32.mrf.mxu0
        %v1052 = vadd.f32 %v995, %v1051
        %1053 = vdwg.mxu0
        %v1054 = vmul.f32 %v1046, 0.01
        %v1055 = vmul.f32 %v1048, 0.01
        %v1056 = vmul.f32 %v1050, 0.01
        %v1057 = vmul.f32 %v1052, 0.01
        %v1058 = vmax.f32 %v1046, %v1054
        %v1059 = vmax.f32 %v1048, %v1055
        %v1060 = vmax.f32 %v1050, %v1056
        %v1061 = vmax.f32 %v1052, %v1057
        %v1062 = vpack.c.bf16 %v1060, %v1058
        %v1063 = vpack.c.bf16 %v1061, %v1059
        %v1064 = vld [vmem:[%s7] sm:$0x1]
        %s1065 = sld [smem:[#allocation2]]
        %v1066 = vstv %s1065
        %v1068 = vsel %vm489, %v1064, 0
        %vm1070 = vcmask 1043456
        %vm1071 = vcmask 1044480
        %v1072 = vsel %vm1070, 4294967295, 65535
        %v1073 = vsel %vm1071, %v1072, 0
        %v1075 = vand.u32 %v1062, %v1073
        %v1078 = vand.u32 %v1063, %v1073
        %1080 = vmatprep.subr.bf16.mxu0 0
        %1081 = vmatpush1.bf16.msra.mxu0 0
        %1082 = vmatprep.subr.bf16.mxu0 0
        %1083 = vmatpush1.bf16.msra.mxu0 0
        %1084 = vmatprep.subr.bf16.mxu0 0
        %1085 = vmatpush1.bf16.msra.mxu0 0
        %1086 = vmatprep.subr.bf16.mxu0 0
        %1087 = vmatpush1.bf16.msra.mxu0 0
        %1088 = vmatprep.subr.bf16.mxu0 0
        %1089 = vmatpush1.bf16.msra.mxu0 0
        %1090 = vmatprep.subr.bf16.mxu0 0
        %1091 = vmatpush1.bf16.msra.mxu0 0
        %1092 = vmatprep.subr.bf16.mxu0 0
        %1093 = vmatpush1.bf16.msra.mxu0 0
        %1094 = vmatprep.subr.bf16.mxu0 %v1078
        %1095 = vmatpush1.bf16.msra.mxu0 %v1075
        %1096 = vmatprep.subr.bf16.mxu0 0
        %1097 = vmatpush2.bf16.msra.mxu0 0
        %1098 = vmatprep.subr.bf16.mxu0 0
        %1099 = vmatpush2.bf16.msra.mxu0 0
        %1100 = vmatprep.subr.bf16.mxu0 0
        %1101 = vmatpush2.bf16.msra.mxu0 0
        %1102 = vmatprep.subr.bf16.mxu0 0
        %1103 = vmatpush2.bf16.msra.mxu0 0
        %1104 = vmatprep.subr.bf16.mxu0 0
        %1105 = vmatpush2.bf16.msra.mxu0 0
        %1106 = vmatprep.subr.bf16.mxu0 0
        %1107 = vmatpush2.bf16.msra.mxu0 0
        %1108 = vmatprep.subr.bf16.mxu0 0
        %1109 = vmatpush2.bf16.msra.mxu0 0
        %1110 = vmatprep.subr.bf16.mxu0 0
        %1111 = vmatpush2.bf16.msra.mxu0 0
        %1112 = vmatprep.mubr.bf16.mxu0 0
        %1113 = vmatmul.mubr.bf16.gmra.mxu0 %v1068
        %v1114 = vpop.f32.mrf.mxu0
        %v1115 = vadd.f32 %v1066, %v1114
        %v1116 = vpop.f32.mrf.mxu0
        %v1117 = vadd.f32 %v1066, %v1116
        %v1118 = vpop.f32.mrf.mxu0
        %v1119 = vpop.f32.mrf.mxu0
        %1120 = vdwg.mxu0
        %v1121 = vxor.u32 %v1115, 2147483648
        %v1122 = vxor.u32 %v1117, 2147483648
        %v1123 = vmul.f32 %v1121, 1.442695
        %v1124 = vpow.pop %v1123
        %v1125 = vmul.f32 %v1122, 1.442695
        %v1126 = vpow.pop %v1125
        %v1127 = vadd.f32 %v1124, 1.0
        %v1128 = vadd.f32 %v1126, 1.0
        %v1129 = vrcp.pop %v1127
        %v1130 = vmul.f32 1.0, %v1129
        %v1131 = vrcp.pop %v1128
        %v1132 = vmul.f32 1.0, %v1131
        %v1135 = vcombine.low %v1130, %v1132
        %v1137 = vunpack.c.l.s4 1966171168
        %v1138 = vunpack.c.0.s8 %v1137
        %v1139 = vlaneseq
        %v1140 = vshrl.u32 %v1139, 7
        %v1141 = vsub.s32 %v1138, %v1140
        %v1142 = vrot.slane %v1135, %v1141
        %v1144 = vunpack.c.l.s4 1966171168
        %v1145 = vunpack.c.0.s8 %v1144
        %v1146 = vlaneseq
        %v1147 = vshrl.u32 %v1146, 7
        %v1148 = vsub.s32 %v1145, %v1147
        %v1149 = vrot.slane %v1142, %v1148
        %v1151 = vlaneseq
        %vm1152 = vcmp.ge.s32.totalorder %v1151, 0
        %vm1153 = vcmp.lt.s32.totalorder %v1151, 256
        %vm1154 = vmand %vm1152, %vm1153
        %1155 = vst.msk [vmem:[%s327] sm:$0x3] %vm1154, %v1149
        %s1156 = sand.u32 %s226, 1
        %s1157 = scalar_lea.sflag [#allocation4], %s1156
        %s1158 = sand.u32 %s226, 1
        %s1159 = smul.addr %s1158, 2
        %s1160 = scalar_lea.vmem [#allocation3], %s1159
        // Predicated region
        $region57: #{tpu_custom_call.1} parent=55 // pred_check
          %p1161 = pneg %p236
        $region58: #{tpu_custom_call.1} parent=55 // pred_check_branch
          %1163 = sbr.rel (%p1161) target = $region60
        $region59: #{tpu_custom_call.1} parent=55 // pred_region
          %s1164 = smul.u32 2, %s24
          %s1166 = ssub.s32 32, 32
          %1167 = vsyncadd %s1157, %s1166
          %s1168 = smul.addr %s1164, 16
          %s1169 = scalar_lea.hbm %s9, %s1168
          %s1171 = sshll.u32 %s1160, 4
          %s1172 = int_to_ptr.vmem [resolvable:$true] %s1171
          %1174 = dma.vmem_to_hbm [thread:$0]  %s1172, 32, %s1169, %s1157
        $region60: #{tpu_custom_call.1} parent=55 // pred_fallthru
          _
      $region56: #{tpu_custom_call.1} parent=5 // pred_fallthru
        _
      %p1175 = scmp.le.s32.totalorder 2, %s19
      // Predicated region
      $region61: #{tpu_custom_call.1} parent=5 // pred_check
        %p1176 = pneg %p1175
      $region62: #{tpu_custom_call.1} parent=5 // pred_check_branch
        %1178 = sbr.rel (%p1176) target = $region64
      $region63: #{tpu_custom_call.1} parent=5 // pred_region
        %s1179 = ssub.s32 %s19, 2
        // Predicated region
        $region65: #{tpu_custom_call.1} parent=63 // pred_check
          %p1180 = pneg %p242
        $region66: #{tpu_custom_call.1} parent=63 // pred_check_branch
          %1182 = sbr.rel (%p1180) target = $region68
        $region67: #{tpu_custom_call.1} parent=63 // pred_region
          %s1183 = sand.u32 %s227, 1
          %s1184 = scalar_lea.sflag [#allocation4], %s1183
          %s1185 = sand.u32 %s227, 1
          %s1186 = smul.addr %s1185, 2
          %s1187 = scalar_lea.vmem [#allocation3], %s1186
          %1188 = dma.done %s1184, 32
        $region68: #{tpu_custom_call.1} parent=63 // pred_fallthru
          _
      $region64: #{tpu_custom_call.1} parent=5 // pred_fallthru
        _
    $region6: #{tpu_custom_call.1} parent=1 // loop_footer
      %s23 = sadd.s32 1, %s19
    $region7: #{tpu_custom_call.1} parent=1 // loop_footer_branch
      %18 = sbr.rel target = $region3
    $region8: #{tpu_custom_call.1} parent=1 // loop_exit
      _
    %1189 = vsyncpa [#allocation4], 1
    %s1190 = scalar_lea.sflag [#allocation4], 1
    %1191 = vsyncpa %s1190, 1

</llo_original>
